<compile_context>
chip_gen: v6e
topology: v6e:2x2x1
jax: 0.10.0
libtpu: 0.0.40
codegen_flags: <defaults>
</compile_context>

<pallas_src>
import numpy as np
import jax
import jax.numpy as jnp
from jax.experimental import pallas as pl
from jax.experimental.pallas import tpu as pltpu


def _rope_embed_kernel(ids_ref, w_ref, out_ref):
    # ids_ref: (TS, n_axes) int32    -- integer positions
    # w_ref:   (n_axes+1, 2*Dh) f32  -- fused omega rows + pi/2 phase row
    # out_ref: (TS, 2*Dh) f32        -- interleaved [sin, cos, sin, cos, ...]
    n_axes = ids_ref.shape[1]
    ids_f = ids_ref[...].astype(jnp.float32)           # VPU convert, hidden under sin
    ang = w_ref[n_axes:n_axes + 1, :]                  # (1, 2Dh) phase row (broadcasts)
    for a in range(n_axes):                            # static tiny unroll (n_axes ~ 3)
        ang = ang + ids_f[:, a:a + 1] * w_ref[a:a + 1, :]
    out_ref[...] = jnp.sin(ang)                        # one EUP pass covers sin AND cos


class EmbedND:
    """JAX/Pallas port of nunchaku EmbedND (no learnable parameters)."""

    def __init__(self, dim: int, theta: int, axes_dim: list[int], seq_tile: int = 256):
        self.dim = dim
        self.theta = theta
        self.axes_dim = axes_dim
        self.seq_tile = seq_tile

        n_axes = len(axes_dim)
        dh_total = sum(d // 2 for d in axes_dim)
        dh2 = 2 * dh_total
        # Fused weight matrix, computed in float64 on host (matches torch's
        # float64 omega), stored as f32 for the kernel.
        w = np.zeros((n_axes + 1, dh2), dtype=np.float64)
        col = 0
        for a, d in enumerate(axes_dim):
            assert d % 2 == 0, "The dimension must be even."
            omega = 1.0 / theta ** (np.arange(0, d, 2, dtype=np.float64) / d)
            w[a, col:col + d] = np.repeat(omega, 2)    # duplicate per (sin, cos) pair
            col += d
        w[n_axes, 1::2] = np.pi / 2.0                  # cos(x) = sin(x + pi/2)
        # TODO(synk): W kept as a pallas_call operand (constant index_map -> DMA'd
        # once across grid steps) rather than a closed-over kernel constant.
        self.w = jnp.asarray(w, dtype=jnp.float32)     # (n_axes+1, 2*Dh)
        self.dh_total = dh_total
        self.dh2 = dh2

    def __call__(self, ids: jax.Array) -> jax.Array:
        # ids: (S, n_axes) int -> output (1, 1, S, sum(axes_dim)//2, 1, 2) f32
        S, n_axes = ids.shape
        assert n_axes == len(self.axes_dim)
        dh2 = self.dh2

        ts = min(self.seq_tile, pl.cdiv(S, 8) * 8)     # sequence tile, multiple of 8
        s_pad = pl.cdiv(S, ts) * ts                    # padded length (no dropped tail)
        ids_i = ids.astype(jnp.int32)
        if s_pad != S:
            ids_i = jnp.pad(ids_i, ((0, s_pad - S), (0, 0)))

        out = pl.pallas_call(
            _rope_embed_kernel,
            out_shape=jax.ShapeDtypeStruct((s_pad, dh2), jnp.float32),
            grid=(s_pad // ts,),
            in_specs=[
                pl.BlockSpec((ts, n_axes), lambda i: (i, 0)),
                pl.BlockSpec((n_axes + 1, dh2), lambda i: (0, 0)),
            ],
            out_specs=pl.BlockSpec((ts, dh2), lambda i: (i, 0)),
            compiler_params=pltpu.CompilerParams(
                dimension_semantics=("parallel",)),
        )(ids_i, self.w)

        # Interleaved (S, 2*Dh) -> (1, 1, S, Dh, 1, 2): pure contiguous reshape
        # (replaces the previous jnp.stack HBM round-trip of the whole table).
        emb = out[:S].reshape(1, S, self.dh_total, 1, 2)
        return emb[:, None]


def _reference_embednd(ids_np: np.ndarray, axes_dim, theta) -> np.ndarray:
    """NumPy float64 reference mirroring the PyTorch forward."""
    outs = []
    for i, d in enumerate(axes_dim):
        scale = np.arange(0, d, 2, dtype=np.float64) / d
        omega = 1.0 / theta ** scale
        pos = ids_np[None, :, i].astype(np.float64)                  # (1, S)
        out = np.einsum('bn,d->bnd', pos, omega)                     # (1, S, d/2)
        stacked = np.stack([np.sin(out), np.cos(out)], axis=-1)      # (1, S, d/2, 2)
        outs.append(stacked.reshape(1, -1, d // 2, 1, 2))
    emb = np.concatenate(outs, axis=-3)                              # (1, S, D/2, 1, 2)
    return emb[:, None].astype(np.float32)                           # (1, 1, S, D/2, 1, 2)


if __name__ == "__main__":
    # Small shapes consistent with FLUX-style usage: dim=32, axes_dim=[8,12,12].
    dim = 32
    theta = 10_000
    axes_dim = [8, 12, 12]
    n_axes = len(axes_dim)
    module = EmbedND(dim=dim, theta=theta, axes_dim=axes_dim)

    key = jax.random.PRNGKey(0)
    k1, k2 = jax.random.split(key)

    # Case 1: tiny aligned sequence (single tile).
    S1 = 16
    ids1 = jax.random.randint(k1, (S1, n_axes), minval=0, maxval=64, dtype=jnp.int32)
    emb1 = jax.block_until_ready(module(ids1))
    ref1 = _reference_embednd(np.asarray(ids1), axes_dim, theta)
    assert emb1.shape == ref1.shape == (1, 1, S1, dim // 2, 1, 2), (emb1.shape, ref1.shape)
    assert emb1.dtype == jnp.float32
    np.testing.assert_allclose(np.asarray(emb1), ref1, atol=2e-5, rtol=2e-5)

    # Case 2: unaligned sequence (exercises the padded tail + multi-step grid).
    S2 = 300
    ids2 = jax.random.randint(k2, (S2, n_axes), minval=0, maxval=64, dtype=jnp.int32)
    emb2 = jax.block_until_ready(module(ids2))
    ref2 = _reference_embednd(np.asarray(ids2), axes_dim, theta)
    assert emb2.shape == ref2.shape == (1, 1, S2, dim // 2, 1, 2), (emb2.shape, ref2.shape)
    np.testing.assert_allclose(np.asarray(emb2), ref2, atol=2e-5, rtol=2e-5)

    print("KERNEL_OK")
</pallas_src>

<mosaic_0001>
module attributes {stable_mosaic.version = 11 : i64} {
  func.func @_rope_embed_kernel(%arg0: i32, %arg1: memref<16x3xi32, #tpu.memory_space<vmem>>, %arg2: memref<4x32xf32, #tpu.memory_space<vmem>>, %arg3: memref<16x32xf32, #tpu.memory_space<vmem>>) attributes {dimension_semantics = [#tpu.dimension_semantics<parallel>], iteration_bounds = array<i64: 1>, scalar_prefetch = 0 : i64, scratch_operands = 0 : i64, tpu.core_type = #tpu.core_type<tc>, window_params = [{transform_indices = @transform_0, window_bounds = array<i64: 16, 3>}, {pipeline_mode = #tpu.pipeline_mode<synchronous>, transform_indices = @transform_1, window_bounds = array<i64: 4, 32>}, {transform_indices = @transform_2, window_bounds = array<i64: 16, 32>}]} {
    %c0 = arith.constant 0 : index
    %c0_0 = arith.constant 0 : index
    %0 = vector.load %arg1[%c0, %c0_0] : memref<16x3xi32, #tpu.memory_space<vmem>>, vector<16x3xi32>
    %1 = arith.sitofp %0 : vector<16x3xi32> to vector<16x3xf32>
    %c3 = arith.constant 3 : index
    %c0_1 = arith.constant 0 : index
    %2 = vector.load %arg2[%c3, %c0_1] : memref<4x32xf32, #tpu.memory_space<vmem>>, vector<1x32xf32>
    %3 = vector.extract_strided_slice %1 {offsets = [0, 0], sizes = [16, 1], strides = [1, 1]} : vector<16x3xf32> to vector<16x1xf32>
    %c0_2 = arith.constant 0 : index
    %c0_3 = arith.constant 0 : index
    %4 = vector.load %arg2[%c0_2, %c0_3] : memref<4x32xf32, #tpu.memory_space<vmem>>, vector<1x32xf32>
    %5 = vector.broadcast %3 : vector<16x1xf32> to vector<16x32xf32>
    %6 = vector.broadcast %4 : vector<1x32xf32> to vector<16x32xf32>
    %7 = arith.mulf %5, %6 : vector<16x32xf32>
    %8 = vector.broadcast %2 : vector<1x32xf32> to vector<16x32xf32>
    %9 = arith.addf %8, %7 : vector<16x32xf32>
    %10 = vector.extract_strided_slice %1 {offsets = [0, 1], sizes = [16, 1], strides = [1, 1]} : vector<16x3xf32> to vector<16x1xf32>
    %c1 = arith.constant 1 : index
    %c0_4 = arith.constant 0 : index
    %11 = vector.load %arg2[%c1, %c0_4] : memref<4x32xf32, #tpu.memory_space<vmem>>, vector<1x32xf32>
    %12 = vector.broadcast %10 : vector<16x1xf32> to vector<16x32xf32>
    %13 = vector.broadcast %11 : vector<1x32xf32> to vector<16x32xf32>
    %14 = arith.mulf %12, %13 : vector<16x32xf32>
    %15 = arith.addf %9, %14 : vector<16x32xf32>
    %16 = vector.extract_strided_slice %1 {offsets = [0, 2], sizes = [16, 1], strides = [1, 1]} : vector<16x3xf32> to vector<16x1xf32>
    %c2 = arith.constant 2 : index
    %c0_5 = arith.constant 0 : index
    %17 = vector.load %arg2[%c2, %c0_5] : memref<4x32xf32, #tpu.memory_space<vmem>>, vector<1x32xf32>
    %18 = vector.broadcast %16 : vector<16x1xf32> to vector<16x32xf32>
    %19 = vector.broadcast %17 : vector<1x32xf32> to vector<16x32xf32>
    %20 = arith.mulf %18, %19 : vector<16x32xf32>
    %21 = arith.addf %15, %20 : vector<16x32xf32>
    %22 = math.sin %21 : vector<16x32xf32>
    %c0_6 = arith.constant 0 : index
    %c0_7 = arith.constant 0 : index
    %23 = vector.load %arg3[%c0_6, %c0_7] : memref<16x32xf32, #tpu.memory_space<vmem>>, vector<16x32xf32>
    tpu.vector_store %arg3[%c0_6, %c0_7], %22 {strides = array<i32>} : memref<16x32xf32, #tpu.memory_space<vmem>>, vector<16x32xf32>,
    return
  }
  func.func @transform_0(%arg0: i32) -> (i32, i32) {
    %c0_i32 = arith.constant 0 : i32
    %c0_i32_0 = arith.constant 0 : i32
    return %arg0, %c0_i32 : i32, i32
  }
  func.func @transform_1(%arg0: i32) -> (i32, i32) {
    %c0_i32 = arith.constant 0 : i32
    %c0_i32_0 = arith.constant 0 : i32
    %c0_i32_1 = arith.constant 0 : i32
    return %c0_i32, %c0_i32_0 : i32, i32
  }
  func.func @transform_2(%arg0: i32) -> (i32, i32) {
    %c0_i32 = arith.constant 0 : i32
    %c0_i32_0 = arith.constant 0 : i32
    return %arg0, %c0_i32 : i32, i32
  }
}

</mosaic_0001>

<llo_original>
// kernel: tpu_custom_call.1
$region0: #{tpu_custom_call.1}
  #allocation0 [shape = 'u32[]', space=smem, size = 0x4, offset = 0x4, fixed_abs, tag = 'smem constant byte address 0x4 - core index']
  #allocation1 [shape = 'u32[144,128]{1,0:T(1,128)}', space=vmem, size = 0x12000, scoped, tag = 'internal scratch']
  %s0 = inlined_call_operand.vmem [shape: s32[16,3], index: 0, kind: input, shape index: {}]
  %s1 = inlined_call_operand.vmem [shape: f32[4,32], index: 1, kind: input, shape index: {}]
  %s2 = inlined_call_operand.hbm [shape: f32[16,32], index: 2, kind: output, shape index: {}]
  %s3 = sld [smem:[#allocation0]]
  $region18: #{tpu_custom_call.1} parent=0
    _
  %s5 = ssub.s32 1, %s3
  %s6 = scalar_select 0, %s5, %s3
  $region1: #{tpu_custom_call.1} parent=0
    #allocation2 [shape = 'u8[8192]{0}', space=vmem, size = 0x2000, scoped, tag = 'output window, operand 0, single buffered']
    #allocation3 [shape = 's32[1]{0}', space=sflag, size = 0x4, scoped, tag = 'scoped memory for tpu_custom_call.1']
    %7 = vsyncpa [#allocation3], 0
    // Predicated region
    $region2: #{tpu_custom_call.1} parent=1 // pred_check
      _
    $region3: #{tpu_custom_call.1} parent=1 // pred_check_branch
      %9 = sbr.rel (0) target = $region5
    $region4: #{tpu_custom_call.1} parent=1 // pred_region
      _
    $region5: #{tpu_custom_call.1} parent=1 // pred_fallthru
      _
    // Predicated region
    $region6: #{tpu_custom_call.1} parent=1 // pred_check
      _
    $region7: #{tpu_custom_call.1} parent=1 // pred_check_branch
      %11 = sbr.rel (0) target = $region9
    $region8: #{tpu_custom_call.1} parent=1 // pred_region
      _
    $region9: #{tpu_custom_call.1} parent=1 // pred_fallthru
      _
    %v12 = vld [vmem:[%s0] sm:$0xff]
    %v13 = vld [vmem:[%s0 + $0x8] sm:$0xff]
    %v14 = vcvt.s32.f32 %v12
    %v15 = vcvt.s32.f32 %v13
    %v16 = vld [vmem:[%s1 + $0x3] sm:$0x1]
    %v17 = vld [vmem:[%s1] sm:$0x1]
    %19 = vset.pattern.permute.xlu0 0
    %20 = vperm.xlu0 %19, %v14
    %v21 = vpop.permute.xlu0 %20
    %24 = vset.pattern.permute.xlu0 0
    %25 = vperm.xlu0 %24, %v15
    %v26 = vpop.permute.xlu0 %25
    %v28 = vlaneseq
    %v29 = vshrl.u32 %v28, 7
    %v30 = vsub.s32 0, %v29
    %v31 = vrot.slane %v17, %v30
    %v32 = vmul.f32 %v21, %v31
    %v33 = vmul.f32 %v26, %v31
    %v34 = vlaneseq
    %v35 = vshrl.u32 %v34, 7
    %v36 = vsub.s32 0, %v35
    %v37 = vrot.slane %v16, %v36
    %v38 = vadd.f32 %v37, %v32
    %v39 = vadd.f32 %v37, %v33
    %v40 = vld [vmem:[%s1 + $0x1] sm:$0x1]
    %41 = vset.pattern.permute.xlu0 1
    %42 = vperm.xlu0 %41, %v14
    %v43 = vpop.permute.xlu0 %42
    %45 = vset.pattern.permute.xlu0 1
    %46 = vperm.xlu0 %45, %v15
    %v47 = vpop.permute.xlu0 %46
    %v49 = vlaneseq
    %v50 = vshrl.u32 %v49, 7
    %v51 = vsub.s32 0, %v50
    %v52 = vrot.slane %v40, %v51
    %v53 = vmul.f32 %v43, %v52
    %v54 = vmul.f32 %v47, %v52
    %v55 = vadd.f32 %v38, %v53
    %v56 = vadd.f32 %v39, %v54
    %v57 = vld [vmem:[%s1 + $0x2] sm:$0x1]
    %58 = vset.pattern.permute.xlu0 2
    %59 = vperm.xlu0 %58, %v14
    %v60 = vpop.permute.xlu0 %59
    %62 = vset.pattern.permute.xlu0 2
    %63 = vperm.xlu0 %62, %v15
    %v64 = vpop.permute.xlu0 %63
    %v66 = vlaneseq
    %v67 = vshrl.u32 %v66, 7
    %v68 = vsub.s32 0, %v67
    %v69 = vrot.slane %v57, %v68
    %v70 = vmul.f32 %v60, %v69
    %v71 = vmul.f32 %v64, %v69
    %v72 = vadd.f32 %v55, %v70
    %v73 = vadd.f32 %v56, %v71
    %v74 = vand.u32 2147483647, %v72
    %vm75 = vcmp.le.f32.partialorder %v74, 0.7853982
    %vm76 = vcmp.lt.s32.totalorder %v72, 0
    %v77 = vand.u32 %v72, 2139095040
    %v78 = vshrl.u32 %v77, 23
    %v79 = vsub.s32 %v78, 127
    %v80 = vand.u32 2147483647, %v72
    %v81 = vand.u32 %v80, 8388607
    %v82 = vor.u32 %v81, 8388608
    %v83 = vsub.s32 0, %v82
    %v84 = vadd.s32 %v79, 1
    %vm85 = vcmp.gt.s32.totalorder %v84, 0
    %v86 = vsel %vm85, %v84, 0
    %v87 = vshrl.u32 %v86, 5
    %v88 = vand.u32 %v86, 31
    %v89 = vsub.s32 32, %v88
    %v90 = vshrl.u32 683565275, %v89
    %v91 = vshll.u32 683565275, %v88
    %v92 = vshrl.u32 2475754826, %v89
    %v93 = vor.u32 %v91, %v92
    %v94 = vshll.u32 2475754826, %v88
    %v95 = vshrl.u32 2131351028, %v89
    %v96 = vor.u32 %v94, %v95
    %v97 = vshll.u32 2131351028, %v88
    %v98 = vshrl.u32 2102212464, %v89
    %v99 = vor.u32 %v97, %v98
    %v100 = vshll.u32 2102212464, %v88
    %v101 = vshrl.u32 920167782, %v89
    %v102 = vor.u32 %v100, %v101
    %v103 = vshll.u32 920167782, %v88
    %v104 = vshrl.u32 1326507024, %v89
    %v105 = vor.u32 %v103, %v104
    %vm106 = vcmp.lt.s32.totalorder %v87, 1
    %vm107 = vcmp.lt.s32.totalorder %v87, 2
    %vm108 = vcmp.lt.s32.totalorder %v87, 3
    %vm109 = vcmp.lt.s32.totalorder %v87, 4
    %v110 = vsel %vm106, %v90, %v93
    %v111 = vsel %vm109, %v99, 2102212464
    %v112 = vsel %vm108, %v96, %v111
    %v113 = vsel %vm107, %v110, %v112
    %v114 = vsel %vm106, %v93, %v96
    %v115 = vsel %vm109, %v102, 920167782
    %v116 = vsel %vm108, %v99, %v115
    %v117 = vsel %vm107, %v114, %v116
    %v118 = vsel %vm106, %v96, %v99
    %v119 = vsel %vm109, %v105, 1326507024
    %v120 = vsel %vm108, %v102, %v119
    %v121 = vsel %vm107, %v118, %v120
    %v122 = vshll.u32 %v82, 8
    %v123 = vmul.u32.u64.compose %v122, %v121
    %v124 = vextract.low.u32 %v123
    %v125 = vextract.high.u32 %v123
    %v126 = vmul.u32.u64.compose %v122, %v117
    %v127 = vextract.low.u32 %v126
    %v128 = vextract.high.u32 %v126
    %v129 = vmul.u32 %v122, %v113
    %v130 = vadd.s32 %v125, %v127
    %vm131 = vc.u32 %v125, %v127
    %v132 = vadd.s32 %v128, 1
    %v133 = vsel %vm131, %v132, %v128
    %v134 = vadd.s32 %v129, %v133
    %v135 = vadd.s32 %v134, 536870912
    %v136 = vshrl.u32 %v135, 30
    %v137 = vshll.u32 %v136, 30
    %v138 = vsub.s32 %v134, %v137
    %vm139 = vcmp.lt.s32.totalorder %v138, 0
    %v140 = vsub.s32 0, %v138
    %v141 = vsel %vm139, %v140, %v138
    %v142 = vclz %v141
    %v143 = vsub.s32 %v142, 2
    %vm144 = vcmp.gt.s32.totalorder 0, %v143
    %v145 = vsel %vm144, 0, %v143
    %v146 = vsub.s32 32, %v145
    %v147 = vshll.u32 %v138, %v145
    %v148 = vshrl.u32 %v130, %v146
    %v149 = vor.u32 %v147, %v148
    %v150 = vsub.s32 4294967266, %v145
    %v151 = vadd.s32 %v150, 127
    %v152 = vshll.u32 %v151, 23
    %v153 = vor.u32 4788187, %v152
    %v154 = vand.u32 2147483647, %v153
    %v156 = vcvt.s32.f32 %v149
    %v157 = vmul.f32 %v156, %v154
    %v158 = vxor.u32 %v157, 2147483648
    %v159 = vsel %vm76, %v158, %v157
    %v160 = vsub.s32 4, %v136
    %v161 = vsel %vm76, %v160, %v136
    %v162 = vsel %vm75, %v72, %v159
    %v163 = vsel %vm75, 0, %v161
    %v164 = vcosq.f32.pop %v162
    %v165 = vsinq.f32.pop %v162
    %vm166 = vweird.f32 %v72
    %v167 = vadd.s32 %v163, 3
    %v168 = vand.u32 %v167, 3
    %vm169 = vcmp.lt.s32.totalorder %v168, 2
    %vm170 = vcmp.eq.s32.totalorder %v168, 0
    %v171 = vxor.u32 %v165, 2147483648
    %v172 = vsel %vm170, %v164, %v171
    %vm173 = vcmp.eq.s32.totalorder %v168, 2
    %v174 = vxor.u32 %v164, 2147483648
    %v175 = vsel %vm173, %v174, %v165
    %v176 = vsel %vm169, %v172, %v175
    %v177 = vsel %vm166, nan, %v176
    %v178 = vand.u32 2147483647, %v73
    %vm179 = vcmp.le.f32.partialorder %v178, 0.7853982
    %vm180 = vcmp.lt.s32.totalorder %v73, 0
    %v181 = vand.u32 %v73, 2139095040
    %v182 = vshrl.u32 %v181, 23
    %v183 = vsub.s32 %v182, 127
    %v184 = vand.u32 2147483647, %v73
    %v185 = vand.u32 %v184, 8388607
    %v186 = vor.u32 %v185, 8388608
    %v187 = vsub.s32 0, %v186
    %v188 = vadd.s32 %v183, 1
    %vm189 = vcmp.gt.s32.totalorder %v188, 0
    %v190 = vsel %vm189, %v188, 0
    %v191 = vshrl.u32 %v190, 5
    %v192 = vand.u32 %v190, 31
    %v193 = vsub.s32 32, %v192
    %v194 = vshrl.u32 683565275, %v193
    %v195 = vshll.u32 683565275, %v192
    %v196 = vshrl.u32 2475754826, %v193
    %v197 = vor.u32 %v195, %v196
    %v198 = vshll.u32 2475754826, %v192
    %v199 = vshrl.u32 2131351028, %v193
    %v200 = vor.u32 %v198, %v199
    %v201 = vshll.u32 2131351028, %v192
    %v202 = vshrl.u32 2102212464, %v193
    %v203 = vor.u32 %v201, %v202
    %v204 = vshll.u32 2102212464, %v192
    %v205 = vshrl.u32 920167782, %v193
    %v206 = vor.u32 %v204, %v205
    %v207 = vshll.u32 920167782, %v192
    %v208 = vshrl.u32 1326507024, %v193
    %v209 = vor.u32 %v207, %v208
    %vm210 = vcmp.lt.s32.totalorder %v191, 1
    %vm211 = vcmp.lt.s32.totalorder %v191, 2
    %vm212 = vcmp.lt.s32.totalorder %v191, 3
    %vm213 = vcmp.lt.s32.totalorder %v191, 4
    %v214 = vsel %vm210, %v194, %v197
    %v215 = vsel %vm213, %v203, 2102212464
    %v216 = vsel %vm212, %v200, %v215
    %v217 = vsel %vm211, %v214, %v216
    %v218 = vsel %vm210, %v197, %v200
    %v219 = vsel %vm213, %v206, 920167782
    %v220 = vsel %vm212, %v203, %v219
    %v221 = vsel %vm211, %v218, %v220
    %v222 = vsel %vm210, %v200, %v203
    %v223 = vsel %vm213, %v209, 1326507024
    %v224 = vsel %vm212, %v206, %v223
    %v225 = vsel %vm211, %v222, %v224
    %v226 = vshll.u32 %v186, 8
    %v227 = vmul.u32.u64.compose %v226, %v225
    %v228 = vextract.low.u32 %v227
    %v229 = vextract.high.u32 %v227
    %v230 = vmul.u32.u64.compose %v226, %v221
    %v231 = vextract.low.u32 %v230
    %v232 = vextract.high.u32 %v230
    %v233 = vmul.u32 %v226, %v217
    %v234 = vadd.s32 %v229, %v231
    %vm235 = vc.u32 %v229, %v231
    %v236 = vadd.s32 %v232, 1
    %v237 = vsel %vm235, %v236, %v232
    %v238 = vadd.s32 %v233, %v237
    %v239 = vadd.s32 %v238, 536870912
    %v240 = vshrl.u32 %v239, 30
    %v241 = vshll.u32 %v240, 30
    %v242 = vsub.s32 %v238, %v241
    %vm243 = vcmp.lt.s32.totalorder %v242, 0
    %v244 = vsub.s32 0, %v242
    %v245 = vsel %vm243, %v244, %v242
    %v246 = vclz %v245
    %v247 = vsub.s32 %v246, 2
    %vm248 = vcmp.gt.s32.totalorder 0, %v247
    %v249 = vsel %vm248, 0, %v247
    %v250 = vsub.s32 32, %v249
    %v251 = vshll.u32 %v242, %v249
    %v252 = vshrl.u32 %v234, %v250
    %v253 = vor.u32 %v251, %v252
    %v254 = vsub.s32 4294967266, %v249
    %v255 = vadd.s32 %v254, 127
    %v256 = vshll.u32 %v255, 23
    %v257 = vor.u32 4788187, %v256
    %v258 = vand.u32 2147483647, %v257
    %v260 = vcvt.s32.f32 %v253
    %v261 = vmul.f32 %v260, %v258
    %v262 = vxor.u32 %v261, 2147483648
    %v263 = vsel %vm180, %v262, %v261
    %v264 = vsub.s32 4, %v240
    %v265 = vsel %vm180, %v264, %v240
    %v266 = vsel %vm179, %v73, %v263
    %v267 = vsel %vm179, 0, %v265
    %v268 = vcosq.f32.pop %v266
    %v269 = vsinq.f32.pop %v266
    %vm270 = vweird.f32 %v73
    %v271 = vadd.s32 %v267, 3
    %v272 = vand.u32 %v271, 3
    %vm273 = vcmp.lt.s32.totalorder %v272, 2
    %vm274 = vcmp.eq.s32.totalorder %v272, 0
    %v275 = vxor.u32 %v269, 2147483648
    %v276 = vsel %vm274, %v268, %v275
    %vm277 = vcmp.eq.s32.totalorder %v272, 2
    %v278 = vxor.u32 %v268, 2147483648
    %v279 = vsel %vm277, %v278, %v269
    %v280 = vsel %vm273, %v276, %v279
    %v281 = vsel %vm270, nan, %v280
    %vm282 = vcmask 261120
    %283 = vst.msk [vmem:[#allocation2] sm:$0xff] %vm282, %v177
    %284 = vst.msk [vmem:[#allocation2 + $0x8] sm:$0xff] %vm282, %v281
    // Predicated region
    $region10: #{tpu_custom_call.1} parent=1 // pred_check
      _
    $region11: #{tpu_custom_call.1} parent=1 // pred_check_branch
      %286 = sbr.rel (0) target = $region13
    $region12: #{tpu_custom_call.1} parent=1 // pred_region
      %s288 = ssub.s32 256, 256
      %289 = vsyncadd [#allocation3], %s288
      %s290 = sshll.u32 [#allocation2], 4
      %s291 = int_to_ptr.vmem [resolvable:$true] %s290
      %296 = dma.vmem_to_hbm [thread:$0]  %s291, 256, %s2, [#allocation3], 128, 128, 8
    $region13: #{tpu_custom_call.1} parent=1 // pred_fallthru
      _
    // Predicated region
    $region14: #{tpu_custom_call.1} parent=1 // pred_check
      _
    $region15: #{tpu_custom_call.1} parent=1 // pred_check_branch
      %298 = sbr.rel (0) target = $region17
    $region16: #{tpu_custom_call.1} parent=1 // pred_region
      %299 = dma.done [#allocation3], 256
    $region17: #{tpu_custom_call.1} parent=1 // pred_fallthru
      _
    %300 = vsyncpa [#allocation3], 1

</llo_original>
